<compile_context>
chip_gen: v7x
topology: tpu7x:2x2x1
jax: 0.10.0
libtpu: 0.0.40
codegen_flags: <defaults>
</compile_context>

<pallas_src>
import math

import jax
import jax.numpy as jnp
from jax import lax
from jax.experimental import pallas as pl
from jax.experimental.pallas import tpu as pltpu


def _round_up(x, m):
    return -(-x // m) * m


def _slab_offsets(kin_p, h2):
    """Row offsets of each 8-row-aligned section inside the packed slab."""
    r_w1 = 0
    r_b1 = kin_p                  # bias1: 1 real row, padded to 8
    r_w2 = r_b1 + 8               # block-diag W2: h2 rows
    r_b2 = r_w2 + h2              # bias2: 1 real row, padded to 8
    r_w3 = r_b2 + 8               # W3^T: 2 real rows, padded to 8
    rows = r_w3 + 8
    return r_w1, r_b1, r_w2, r_b2, r_w3, rows


# ---------------------------------------------------------------------------
# Kernel
# ---------------------------------------------------------------------------
def _make_kernel(kin_p, h2):
    """Fused twin-Q kernel for static feature / hidden sizes."""
    _, r_b1, r_w2, r_b2, r_w3, _ = _slab_offsets(kin_p, h2)

    def kernel(xu_ref, pa_ref, b3_ref, out_ref):
        xu = xu_ref[...]                              # (bb, kin_p)

        # 8-row-aligned static views into the packed parameter slab.
        w1 = pa_ref[0:kin_p, :]                       # (kin_p, 2H)
        b1 = pa_ref[r_b1:r_b1 + 1, :]                 # (1, 2H)
        w2 = pa_ref[r_w2:r_w2 + h2, :]                # (2H, 2H) block-diag
        b2 = pa_ref[r_b2:r_b2 + 1, :]                 # (1, 2H)
        w3t = pa_ref[r_w3:r_w3 + 2, :]                # (2, 2H)  W3 transposed
        b3t = b3_ref[...]                             # (2, 1)

        # Layer 1: single K=kin_p dot ([state|action|pad] already fused).
        h = jnp.dot(xu, w1, preferred_element_type=jnp.float32) + b1
        h = jnp.maximum(h, 0.0)
        # Layer 2: block-diagonal W2 keeps the two Q heads independent.
        h = jnp.dot(h, w2, preferred_element_type=jnp.float32) + b2
        h = jnp.maximum(h, 0.0)
        # Layer 3, emitted lane-dense as (2, bb): contract W3^T (2, 2H) with
        # h (bb, 2H) over 2H (transposed-RHS dot, flash-attn dim numbers).
        y = lax.dot_general(w3t, h, (((1,), (1,)), ((), ())),
                            preferred_element_type=jnp.float32)
        out_ref[...] = y + b3t

    return kernel


# ---------------------------------------------------------------------------
# Wrapper
# ---------------------------------------------------------------------------
def critic_forward(state, action, slab_a, b3t):
    """Returns (q1, q2), each (B, 1) float32, matching the PyTorch forward."""
    B, state_dim = state.shape
    n_actions = action.shape[1]
    kin = state_dim + n_actions
    kin_p = _round_up(kin, 8)
    h2 = slab_a.shape[1]

    # Fold torch.cat([state, action], 1) (+ zero-pad to an 8-aligned K) into one
    # feature slab -> one batch DMA per tile and a single K-dim dot in layer 1.
    xu = jnp.concatenate([state, action], axis=1)
    if kin_p != kin:
        xu = jnp.pad(xu, ((0, 0), (0, kin_p - kin)))

    # Batch tiling: one tile up to 1024 rows; above that, an even tile count
    # (<= ~2048 rows each, 128-aligned for the lane-dense transposed output)
    # so v7x's two TensorCores split the "parallel" grid evenly.
    if B <= 1024:
        nb = 1
        block_b = max(8, _round_up(B, 8))
    else:
        nb = 2 * pl.cdiv(B, 2 * 2048)
        block_b = _round_up(pl.cdiv(B, nb), 128)
    bp = nb * block_b
    if bp != B:
        xu = jnp.pad(xu, ((0, bp - B), (0, 0)))

    kernel = _make_kernel(kin_p, h2)

    out = pl.pallas_call(
        kernel,
        grid=(nb,),
        in_specs=[
            pl.BlockSpec((block_b, kin_p), lambda i: (i, 0)),
            pl.BlockSpec(slab_a.shape, lambda i: (0, 0)),   # replicated weights
            pl.BlockSpec(b3t.shape, lambda i: (0, 0)),      # replicated bias3
        ],
        out_specs=pl.BlockSpec((2, block_b), lambda i: (0, i)),
        out_shape=jax.ShapeDtypeStruct((2, bp), jnp.float32),
        compiler_params=pltpu.CompilerParams(
            dimension_semantics=("parallel",)),
    )(xu, slab_a, b3t)

    q1 = out[0, :B][:, None]
    q2 = out[1, :B][:, None]
    return q1, q2


# ---------------------------------------------------------------------------
# Parameter init / packing
# ---------------------------------------------------------------------------
def _xavier_uniform(key, fan_in, fan_out):
    # Matches nn.init.xavier_uniform_(weight, gain=1) on a torch Linear weight
    # of shape (out, in); we return the transpose (in, out) for x @ W.
    bound = math.sqrt(6.0 / (fan_in + fan_out))
    return jax.random.uniform(key, (fan_in, fan_out), jnp.float32,
                              minval=-bound, maxval=bound)


def init_params(key, input_dim, n_actions, hidden_sizes=(32, 32)):
    layer_sizes = [input_dim + n_actions] + list(hidden_sizes) + [1]
    params = {}
    for q in ("q1", "q2"):
        for li, (i, o) in enumerate(zip(layer_sizes[:-1], layer_sizes[1:]), start=1):
            key, sub = jax.random.split(key)
            params[f"{q}_w{li}"] = _xavier_uniform(sub, i, o)
            params[f"{q}_b{li}"] = jnp.zeros((1, o), jnp.float32)  # constant_(0)
    return params


def pack_params(params, hidden):
    """Pack the 12 per-head arrays into one 8-row-aligned slab + a (2,1) bias."""
    H = hidden
    h2 = 2 * H
    assert h2 % 8 == 0, "hidden width must be a multiple of 4"
    kin = params["q1_w1"].shape[0]
    kin_p = _round_up(kin, 8)

    zH = jnp.zeros((H, H), jnp.float32)
    z1 = jnp.zeros((H, 1), jnp.float32)

    def pad_rows(x, rows):
        return jnp.pad(x, ((0, rows - x.shape[0]), (0, 0)))

    w1 = jnp.concatenate([params["q1_w1"], params["q2_w1"]], axis=1)     # (kin, 2H)
    b1 = jnp.concatenate([params["q1_b1"], params["q2_b1"]], axis=1)     # (1, 2H)
    w2 = jnp.concatenate(
        [jnp.concatenate([params["q1_w2"], zH], axis=1),
         jnp.concatenate([zH, params["q2_w2"]], axis=1)], axis=0)        # (2H, 2H)
    b2 = jnp.concatenate([params["q1_b2"], params["q2_b2"]], axis=1)     # (1, 2H)
    w3 = jnp.concatenate(
        [jnp.concatenate([params["q1_w3"], z1], axis=1),
         jnp.concatenate([z1, params["q2_w3"]], axis=1)], axis=0)        # (2H, 2)
    b3t = jnp.concatenate([params["q1_b3"], params["q2_b3"]], axis=1).T  # (2, 1)

    slab_a = jnp.concatenate([
        pad_rows(w1, kin_p),     # zero rows line up with zero-padded xu columns
        pad_rows(b1, 8),
        w2,
        pad_rows(b2, 8),
        pad_rows(w3.T, 8),       # W3 stored transposed for the (2, bb) output
    ], axis=0)

    rows = _slab_offsets(kin_p, h2)[-1]
    assert slab_a.shape == (rows, h2)
    return slab_a, b3t


# ---------------------------------------------------------------------------
# Plain-JAX reference (mirrors the PyTorch forward exactly)
# ---------------------------------------------------------------------------
def _reference_forward(state, action, params):
    xu = jnp.concatenate([state, action], axis=1)

    def mlp(q):
        h = jnp.maximum(xu @ params[f"{q}_w1"] + params[f"{q}_b1"], 0.0)
        h = jnp.maximum(h @ params[f"{q}_w2"] + params[f"{q}_b2"], 0.0)
        return h @ params[f"{q}_w3"] + params[f"{q}_b3"]

    return mlp("q1"), mlp("q2")


if __name__ == "__main__":
    key = jax.random.PRNGKey(0)

    # Small, module-consistent shapes: input_dim=(12,), n_actions=4, hidden=[32,32].
    B, state_dim, n_actions = 8, 12, 4
    hidden = 32

    key, ks, ka, kp = jax.random.split(key, 4)
    state = jax.random.normal(ks, (B, state_dim), jnp.float32)
    action = jax.random.normal(ka, (B, n_actions), jnp.float32)

    params = init_params(kp, state_dim, n_actions, (hidden, hidden))
    slab_a, b3t = pack_params(params, hidden)   # one-time packing

    q1, q2 = critic_forward(state, action, slab_a, b3t)
    jax.block_until_ready((q1, q2))

    # Verify against the plain-JAX mirror of the PyTorch forward.
    r1, r2 = _reference_forward(state, action, params)
    assert q1.shape == (B, 1) and q2.shape == (B, 1)
    assert jnp.allclose(q1, r1, atol=1e-5), "q1 mismatch"
    assert jnp.allclose(q2, r2, atol=1e-5), "q2 mismatch"

    # TODO(synk): Adam optimizer / MultiStepLR scheduler / MSE|SmoothL1 loss are
    # training machinery with no forward-pass Pallas equivalent; not implemented.
    print("KERNEL_OK")
</pallas_src>

<mosaic_0001>
module attributes {stable_mosaic.version = 11 : i64} {
  func.func @kernel(%arg0: i32, %arg1: memref<8x16xf32, #tpu.memory_space<vmem>>, %arg2: memref<104x64xf32, #tpu.memory_space<vmem>>, %arg3: memref<2x1xf32, #tpu.memory_space<vmem>>, %arg4: memref<2x8xf32, #tpu.memory_space<vmem>>) attributes {dimension_semantics = [#tpu.dimension_semantics<parallel>], iteration_bounds = array<i64: 1>, scalar_prefetch = 0 : i64, scratch_operands = 0 : i64, tpu.core_type = #tpu.core_type<tc>, window_params = [{transform_indices = @transform_0, window_bounds = array<i64: 8, 16>}, {pipeline_mode = #tpu.pipeline_mode<synchronous>, transform_indices = @transform_1, window_bounds = array<i64: 104, 64>}, {pipeline_mode = #tpu.pipeline_mode<synchronous>, transform_indices = @transform_2, window_bounds = array<i64: 2, 1>}, {transform_indices = @transform_3, window_bounds = array<i64: 2, 8>}]} {
    %c0 = arith.constant 0 : index
    %c0_0 = arith.constant 0 : index
    %0 = vector.load %arg1[%c0, %c0_0] : memref<8x16xf32, #tpu.memory_space<vmem>>, vector<8x16xf32>
    %c0_1 = arith.constant 0 : index
    %c0_2 = arith.constant 0 : index
    %1 = vector.load %arg2[%c0_1, %c0_2] : memref<104x64xf32, #tpu.memory_space<vmem>>, vector<16x64xf32>
    %c16 = arith.constant 16 : index
    %c0_3 = arith.constant 0 : index
    %2 = vector.load %arg2[%c16, %c0_3] : memref<104x64xf32, #tpu.memory_space<vmem>>, vector<1x64xf32>
    %c24 = arith.constant 24 : index
    %c0_4 = arith.constant 0 : index
    %3 = vector.load %arg2[%c24, %c0_4] : memref<104x64xf32, #tpu.memory_space<vmem>>, vector<64x64xf32>
    %c88 = arith.constant 88 : index
    %c0_5 = arith.constant 0 : index
    %4 = vector.load %arg2[%c88, %c0_5] : memref<104x64xf32, #tpu.memory_space<vmem>>, vector<1x64xf32>
    %c96 = arith.constant 96 : index
    %c0_6 = arith.constant 0 : index
    %5 = vector.load %arg2[%c96, %c0_6] : memref<104x64xf32, #tpu.memory_space<vmem>>, vector<2x64xf32>
    %c0_7 = arith.constant 0 : index
    %c0_8 = arith.constant 0 : index
    %6 = vector.load %arg3[%c0_7, %c0_8] : memref<2x1xf32, #tpu.memory_space<vmem>>, vector<2x1xf32>
    %cst = arith.constant dense<0.000000e+00> : vector<8x64xf32>
    %7 = tpu.matmul %0, %1, %cst {dimension_numbers = #tpu.dot_dimension_numbers<[1], [0], [0], [1], [0, 0, 1, 1], [], []>} : vector<8x16xf32>, vector<16x64xf32>, vector<8x64xf32> -> vector<8x64xf32>
    %8 = vector.broadcast %2 : vector<1x64xf32> to vector<8x64xf32>
    %9 = arith.addf %7, %8 : vector<8x64xf32>
    %cst_9 = arith.constant 0.000000e+00 : f32
    %10 = vector.broadcast %cst_9 : f32 to vector<8x64xf32>
    %11 = arith.maximumf %9, %10 : vector<8x64xf32>
    %cst_10 = arith.constant dense<0.000000e+00> : vector<8x64xf32>
    %12 = tpu.matmul %11, %3, %cst_10 {dimension_numbers = #tpu.dot_dimension_numbers<[1], [0], [0], [1], [0, 0, 1, 1], [], []>} : vector<8x64xf32>, vector<64x64xf32>, vector<8x64xf32> -> vector<8x64xf32>
    %13 = vector.broadcast %4 : vector<1x64xf32> to vector<8x64xf32>
    %14 = arith.addf %12, %13 : vector<8x64xf32>
    %cst_11 = arith.constant 0.000000e+00 : f32
    %15 = vector.broadcast %cst_11 : f32 to vector<8x64xf32>
    %16 = arith.maximumf %14, %15 : vector<8x64xf32>
    %cst_12 = arith.constant dense<0.000000e+00> : vector<2x8xf32>
    %17 = tpu.matmul %5, %16, %cst_12 {dimension_numbers = #tpu.dot_dimension_numbers<[1], [1], [0], [0], [0, 0, 1, 0], [], []>} : vector<2x64xf32>, vector<8x64xf32>, vector<2x8xf32> -> vector<2x8xf32>
    %18 = vector.broadcast %6 : vector<2x1xf32> to vector<2x8xf32>
    %19 = arith.addf %17, %18 : vector<2x8xf32>
    %c0_13 = arith.constant 0 : index
    %c0_14 = arith.constant 0 : index
    %20 = vector.load %arg4[%c0_13, %c0_14] : memref<2x8xf32, #tpu.memory_space<vmem>>, vector<2x8xf32>
    tpu.vector_store %arg4[%c0_13, %c0_14], %19 {strides = array<i32>} : memref<2x8xf32, #tpu.memory_space<vmem>>, vector<2x8xf32>,
    return
  }
  func.func @transform_0(%arg0: i32) -> (i32, i32) {
    %c0_i32 = arith.constant 0 : i32
    %c0_i32_0 = arith.constant 0 : i32
    return %arg0, %c0_i32 : i32, i32
  }
  func.func @transform_1(%arg0: i32) -> (i32, i32) {
    %c0_i32 = arith.constant 0 : i32
    %c0_i32_0 = arith.constant 0 : i32
    %c0_i32_1 = arith.constant 0 : i32
    return %c0_i32, %c0_i32_0 : i32, i32
  }
  func.func @transform_2(%arg0: i32) -> (i32, i32) {
    %c0_i32 = arith.constant 0 : i32
    %c0_i32_0 = arith.constant 0 : i32
    %c0_i32_1 = arith.constant 0 : i32
    return %c0_i32, %c0_i32_0 : i32, i32
  }
  func.func @transform_3(%arg0: i32) -> (i32, i32) {
    %c0_i32 = arith.constant 0 : i32
    %c0_i32_0 = arith.constant 0 : i32
    return %c0_i32, %arg0 : i32, i32
  }
}

</mosaic_0001>

<llo_original>
// kernel: tpu_custom_call.1
$region0: #{tpu_custom_call.1}
  #allocation0 [shape = 'u32[]', space=smem, size = 0x4, offset = 0x4, fixed_abs, tag = 'smem constant byte address 0x4 - core index']
  #allocation1 [shape = 'u32[144,128]{1,0:T(1,128)}', space=vmem, size = 0x12000, scoped, tag = 'internal scratch']
  %s0 = inlined_call_operand.vmem [shape: f32[8,16], index: 0, kind: input, shape index: {}]
  %s1 = inlined_call_operand.vmem [shape: f32[104,64], index: 1, kind: input, shape index: {}]
  %s2 = inlined_call_operand.vmem [shape: f32[2,1], index: 2, kind: input, shape index: {}]
  %s3 = inlined_call_operand.hbm [shape: f32[2,8], index: 3, kind: output, shape index: {}]
  %s4 = sld [smem:[#allocation0]]
  $region22: #{tpu_custom_call.1} parent=0
    _
  %s6 = ssub.s32 1, %s4
  %s7 = scalar_select 0, %s6, %s4
  $region1: #{tpu_custom_call.1} parent=0
    #allocation2 [shape = 'u8[1024]{0}', space=vmem, size = 0x400, scoped, tag = 'output window, operand 0, single buffered']
    #allocation3 [shape = 's32[1]{0}', space=sflag, size = 0x4, scoped, tag = 'scoped memory for tpu_custom_call.1']
    %8 = vsyncpa [#allocation3], 0
    // Predicated region
    $region2: #{tpu_custom_call.1} parent=1 // pred_check
      _
    $region3: #{tpu_custom_call.1} parent=1 // pred_check_branch
      %10 = sbr.rel (0) target = $region5
    $region4: #{tpu_custom_call.1} parent=1 // pred_region
      _
    $region5: #{tpu_custom_call.1} parent=1 // pred_fallthru
      _
    // Predicated region
    $region6: #{tpu_custom_call.1} parent=1 // pred_check
      _
    $region7: #{tpu_custom_call.1} parent=1 // pred_check_branch
      %12 = sbr.rel (0) target = $region9
    $region8: #{tpu_custom_call.1} parent=1 // pred_region
      _
    $region9: #{tpu_custom_call.1} parent=1 // pred_fallthru
      _
    // Predicated region
    $region10: #{tpu_custom_call.1} parent=1 // pred_check
      _
    $region11: #{tpu_custom_call.1} parent=1 // pred_check_branch
      %14 = sbr.rel (0) target = $region13
    $region12: #{tpu_custom_call.1} parent=1 // pred_region
      _
    $region13: #{tpu_custom_call.1} parent=1 // pred_fallthru
      _
    %v15 = vld [vmem:[%s0] sm:$0xff]
    %v16 = vld [vmem:[%s1] sm:$0xff]
    %v17 = vld [vmem:[%s1 + $0x8] sm:$0xff]
    %v18 = vld [vmem:[%s1 + $0x10] sm:$0x1]
    %v19 = vld [vmem:[%s1 + $0x18] sm:$0xff]
    %v20 = vld [vmem:[%s1 + $0x20] sm:$0xff]
    %v21 = vld [vmem:[%s1 + $0x28] sm:$0xff]
    %v22 = vld [vmem:[%s1 + $0x30] sm:$0xff]
    %v23 = vld [vmem:[%s1 + $0x38] sm:$0xff]
    %v24 = vld [vmem:[%s1 + $0x40] sm:$0xff]
    %v25 = vld [vmem:[%s1 + $0x48] sm:$0xff]
    %v26 = vld [vmem:[%s1 + $0x50] sm:$0xff]
    %v27 = vld [vmem:[%s1 + $0x58] sm:$0x1]
    %v28 = vld [vmem:[%s1 + $0x60] sm:$0x3]
    %v29 = vld [vmem:[%s2] sm:$0x3]
    %v30 = vlaneseq
    %v31 = vshrl.u32 %v30, 7
    %v32 = vsub.s32 0, %v31
    %v33 = vrot.slane %v18, %v32
    %vm34 = vcmask 130048
    %v36 = vsel %vm34, %v15, 0
    %38 = vmatprep.subr.mxu0 0.0
    %39 = vmatpush1.msra.mxu0 %v16
    %40 = vmatprep.subr.mxu0 0.0
    %41 = vmatpush1.msra.mxu0 %v17
    %42 = vmatprep.subr.mxu0 0.0
    %43 = vmatpush1.msra.mxu0 0.0
    %44 = vmatprep.subr.mxu0 0.0
    %45 = vmatpush1.msra.mxu0 0.0
    %46 = vmatprep.subr.mxu0 0.0
    %47 = vmatpush1.msra.mxu0 0.0
    %48 = vmatprep.subr.mxu0 0.0
    %49 = vmatpush1.msra.mxu0 0.0
    %50 = vmatprep.subr.mxu0 0.0
    %51 = vmatpush1.msra.mxu0 0.0
    %52 = vmatprep.subr.mxu0 0.0
    %53 = vmatpush1.msra.mxu0 0.0
    %54 = vmatprep.subr.mxu0 0.0
    %55 = vmatpush1.msra.mxu0 0.0
    %56 = vmatprep.subr.mxu0 0.0
    %57 = vmatpush1.msra.mxu0 0.0
    %58 = vmatprep.subr.mxu0 0.0
    %59 = vmatpush1.msra.mxu0 0.0
    %60 = vmatprep.subr.mxu0 0.0
    %61 = vmatpush1.msra.mxu0 0.0
    %62 = vmatprep.subr.mxu0 0.0
    %63 = vmatpush1.msra.mxu0 0.0
    %64 = vmatprep.subr.mxu0 0.0
    %65 = vmatpush1.msra.mxu0 0.0
    %66 = vmatprep.subr.mxu0 0.0
    %67 = vmatpush1.msra.mxu0 0.0
    %68 = vmatprep.subr.mxu0 0.0
    %69 = vmatpush1.msra.mxu0 0.0
    %70 = vmatprep.subr.mxu0 0.0
    %71 = vmatpush1.msra.mxu0 0.0
    %72 = vmatprep.subr.mxu0 0.0
    %73 = vmatpush1.msra.mxu0 0.0
    %74 = vmatprep.subr.mxu0 0.0
    %75 = vmatpush1.msra.mxu0 0.0
    %76 = vmatprep.subr.mxu0 0.0
    %77 = vmatpush1.msra.mxu0 0.0
    %78 = vmatprep.subr.mxu0 0.0
    %79 = vmatpush1.msra.mxu0 0.0
    %80 = vmatprep.subr.mxu0 0.0
    %81 = vmatpush1.msra.mxu0 0.0
    %82 = vmatprep.subr.mxu0 0.0
    %83 = vmatpush1.msra.mxu0 0.0
    %84 = vmatprep.subr.mxu0 0.0
    %85 = vmatpush1.msra.mxu0 0.0
    %86 = vmatprep.subr.mxu0 0.0
    %87 = vmatpush1.msra.mxu0 0.0
    %88 = vmatprep.subr.mxu0 0.0
    %89 = vmatpush1.msra.mxu0 0.0
    %90 = vmatprep.subr.mxu0 0.0
    %91 = vmatpush1.msra.mxu0 0.0
    %92 = vmatprep.subr.mxu0 0.0
    %93 = vmatpush1.msra.mxu0 0.0
    %94 = vmatprep.subr.mxu0 0.0
    %95 = vmatpush1.msra.mxu0 0.0
    %96 = vmatprep.subr.mxu0 0.0
    %97 = vmatpush1.msra.mxu0 0.0
    %98 = vmatprep.subr.mxu0 0.0
    %99 = vmatpush1.msra.mxu0 0.0
    %100 = vmatprep.subr.mxu0 0.0
    %101 = vmatpush1.msra.mxu0 0.0
    %102 = vmatprep.mubr.f32.mxu0 0.0
    %103 = vmatmul.mubr.f32.gmra.mrb[0].mxu0 %v36
    %v104 = vpop.f32.mrb[0].mxu0
    %v105 = vadd.f32 %v33, %v104
    %v106 = vpop.f32.mrb[0].mxu0
    %107 = vdwg.mxu0
    %v108 = vmax.f32 %v105, 0.0
    %v109 = vlaneseq
    %v110 = vshrl.u32 %v109, 7
    %v111 = vsub.s32 0, %v110
    %v112 = vrot.slane %v27, %v111
    %vm113 = vcmask 523264
    %v115 = vsel %vm113, %v108, 0
    %117 = vmatprep.subr.mxu0 0.0
    %118 = vmatpush1.msra.mxu0 %v19
    %119 = vmatprep.subr.mxu0 0.0
    %120 = vmatpush1.msra.mxu0 %v20
    %121 = vmatprep.subr.mxu0 0.0
    %122 = vmatpush1.msra.mxu0 %v21
    %123 = vmatprep.subr.mxu0 0.0
    %124 = vmatpush1.msra.mxu0 %v22
    %125 = vmatprep.subr.mxu0 0.0
    %126 = vmatpush1.msra.mxu0 %v23
    %127 = vmatprep.subr.mxu0 0.0
    %128 = vmatpush1.msra.mxu0 %v24
    %129 = vmatprep.subr.mxu0 0.0
    %130 = vmatpush1.msra.mxu0 %v25
    %131 = vmatprep.subr.mxu0 0.0
    %132 = vmatpush1.msra.mxu0 %v26
    %133 = vmatprep.subr.mxu0 0.0
    %134 = vmatpush1.msra.mxu0 0.0
    %135 = vmatprep.subr.mxu0 0.0
    %136 = vmatpush1.msra.mxu0 0.0
    %137 = vmatprep.subr.mxu0 0.0
    %138 = vmatpush1.msra.mxu0 0.0
    %139 = vmatprep.subr.mxu0 0.0
    %140 = vmatpush1.msra.mxu0 0.0
    %141 = vmatprep.subr.mxu0 0.0
    %142 = vmatpush1.msra.mxu0 0.0
    %143 = vmatprep.subr.mxu0 0.0
    %144 = vmatpush1.msra.mxu0 0.0
    %145 = vmatprep.subr.mxu0 0.0
    %146 = vmatpush1.msra.mxu0 0.0
    %147 = vmatprep.subr.mxu0 0.0
    %148 = vmatpush1.msra.mxu0 0.0
    %149 = vmatprep.subr.mxu0 0.0
    %150 = vmatpush1.msra.mxu0 0.0
    %151 = vmatprep.subr.mxu0 0.0
    %152 = vmatpush1.msra.mxu0 0.0
    %153 = vmatprep.subr.mxu0 0.0
    %154 = vmatpush1.msra.mxu0 0.0
    %155 = vmatprep.subr.mxu0 0.0
    %156 = vmatpush1.msra.mxu0 0.0
    %157 = vmatprep.subr.mxu0 0.0
    %158 = vmatpush1.msra.mxu0 0.0
    %159 = vmatprep.subr.mxu0 0.0
    %160 = vmatpush1.msra.mxu0 0.0
    %161 = vmatprep.subr.mxu0 0.0
    %162 = vmatpush1.msra.mxu0 0.0
    %163 = vmatprep.subr.mxu0 0.0
    %164 = vmatpush1.msra.mxu0 0.0
    %165 = vmatprep.subr.mxu0 0.0
    %166 = vmatpush1.msra.mxu0 0.0
    %167 = vmatprep.subr.mxu0 0.0
    %168 = vmatpush1.msra.mxu0 0.0
    %169 = vmatprep.subr.mxu0 0.0
    %170 = vmatpush1.msra.mxu0 0.0
    %171 = vmatprep.subr.mxu0 0.0
    %172 = vmatpush1.msra.mxu0 0.0
    %173 = vmatprep.subr.mxu0 0.0
    %174 = vmatpush1.msra.mxu0 0.0
    %175 = vmatprep.subr.mxu0 0.0
    %176 = vmatpush1.msra.mxu0 0.0
    %177 = vmatprep.subr.mxu0 0.0
    %178 = vmatpush1.msra.mxu0 0.0
    %179 = vmatprep.subr.mxu0 0.0
    %180 = vmatpush1.msra.mxu0 0.0
    %181 = vmatprep.mubr.f32.mxu0 0.0
    %182 = vmatmul.mubr.f32.gmra.mrb[0].mxu0 %v115
    %v183 = vpop.f32.mrb[0].mxu0
    %v184 = vadd.f32 %v112, %v183
    %v185 = vpop.f32.mrb[0].mxu0
    %186 = vdwg.mxu0
    %v187 = vmax.f32 %v184, 0.0
    %189 = vset.pattern.permute.xlu0 0
    %190 = vperm.xlu0 %189, %v29
    %v191 = vpop.permute.xlu0 %190
    %v194 = vsel %vm113, %v28, 0
    %v197 = vsel %vm113, %v187, 0
    %199 = vmatprep.subr.mxu0 0.0
    %200 = vmatpush1.xpose.msra.mxu0 %v197
    %201 = vmatprep.subr.mxu0 0.0
    %202 = vmatpush1.xpose.msra.mxu0 0.0
    %203 = vmatprep.subr.mxu0 0.0
    %204 = vmatpush1.xpose.msra.mxu0 0.0
    %205 = vmatprep.subr.mxu0 0.0
    %206 = vmatpush1.xpose.msra.mxu0 0.0
    %207 = vmatprep.subr.mxu0 0.0
    %208 = vmatpush1.xpose.msra.mxu0 0.0
    %209 = vmatprep.subr.mxu0 0.0
    %210 = vmatpush1.xpose.msra.mxu0 0.0
    %211 = vmatprep.subr.mxu0 0.0
    %212 = vmatpush1.xpose.msra.mxu0 0.0
    %213 = vmatprep.subr.mxu0 0.0
    %214 = vmatpush1.xpose.msra.mxu0 0.0
    %215 = vmatprep.subr.mxu0 0.0
    %216 = vmatpush1.xpose.msra.mxu0 0.0
    %217 = vmatprep.subr.mxu0 0.0
    %218 = vmatpush1.xpose.msra.mxu0 0.0
    %219 = vmatprep.subr.mxu0 0.0
    %220 = vmatpush1.xpose.msra.mxu0 0.0
    %221 = vmatprep.subr.mxu0 0.0
    %222 = vmatpush1.xpose.msra.mxu0 0.0
    %223 = vmatprep.subr.mxu0 0.0
    %224 = vmatpush1.xpose.msra.mxu0 0.0
    %225 = vmatprep.subr.mxu0 0.0
    %226 = vmatpush1.xpose.msra.mxu0 0.0
    %227 = vmatprep.subr.mxu0 0.0
    %228 = vmatpush1.xpose.msra.mxu0 0.0
    %229 = vmatprep.subr.mxu0 0.0
    %230 = vmatpush1.xpose.msra.mxu0 0.0
    %231 = vmatprep.subr.mxu0 0.0
    %232 = vmatpush1.xpose.msra.mxu0 0.0
    %233 = vmatprep.subr.mxu0 0.0
    %234 = vmatpush1.xpose.msra.mxu0 0.0
    %235 = vmatprep.subr.mxu0 0.0
    %236 = vmatpush1.xpose.msra.mxu0 0.0
    %237 = vmatprep.subr.mxu0 0.0
    %238 = vmatpush1.xpose.msra.mxu0 0.0
    %239 = vmatprep.subr.mxu0 0.0
    %240 = vmatpush1.xpose.msra.mxu0 0.0
    %241 = vmatprep.subr.mxu0 0.0
    %242 = vmatpush1.xpose.msra.mxu0 0.0
    %243 = vmatprep.subr.mxu0 0.0
    %244 = vmatpush1.xpose.msra.mxu0 0.0
    %245 = vmatprep.subr.mxu0 0.0
    %246 = vmatpush1.xpose.msra.mxu0 0.0
    %247 = vmatprep.subr.mxu0 0.0
    %248 = vmatpush1.xpose.msra.mxu0 0.0
    %249 = vmatprep.subr.mxu0 0.0
    %250 = vmatpush1.xpose.msra.mxu0 0.0
    %251 = vmatprep.subr.mxu0 0.0
    %252 = vmatpush1.xpose.msra.mxu0 0.0
    %253 = vmatprep.subr.mxu0 0.0
    %254 = vmatpush1.xpose.msra.mxu0 0.0
    %255 = vmatprep.subr.mxu0 0.0
    %256 = vmatpush1.xpose.msra.mxu0 0.0
    %257 = vmatprep.subr.mxu0 0.0
    %258 = vmatpush1.xpose.msra.mxu0 0.0
    %259 = vmatprep.subr.mxu0 0.0
    %260 = vmatpush1.xpose.msra.mxu0 0.0
    %261 = vmatprep.subr.mxu0 0.0
    %262 = vmatpush1.xpose.msra.mxu0 0.0
    %263 = vmatprep.mubr.f32.mxu0 0.0
    %264 = vmatmul.mubr.f32.gmra.mrb[0].mxu0 %v194
    %v265 = vpop.f32.mrb[0].mxu0
    %v266 = vadd.f32 %v191, %v265
    %v267 = vpop.f32.mrb[0].mxu0
    %268 = vdwg.mxu0
    %vm269 = vcmask 58368
    %270 = vst.msk [vmem:[#allocation2] sm:$0x3] %vm269, %v266
    // Predicated region
    $region14: #{tpu_custom_call.1} parent=1 // pred_check
      _
    $region15: #{tpu_custom_call.1} parent=1 // pred_check_branch
      %272 = sbr.rel (0) target = $region17
    $region16: #{tpu_custom_call.1} parent=1 // pred_region
      %s274 = ssub.s32 32, 32
      %275 = vsyncadd [#allocation3], %s274
      %s277 = sshll.u32 [#allocation2], 4
      %s278 = int_to_ptr.vmem [resolvable:$true] %s277
      %280 = dma.vmem_to_hbm [thread:$0]  %s278, 32, %s3, [#allocation3]
    $region17: #{tpu_custom_call.1} parent=1 // pred_fallthru
      _
    // Predicated region
    $region18: #{tpu_custom_call.1} parent=1 // pred_check
      _
    $region19: #{tpu_custom_call.1} parent=1 // pred_check_branch
      %282 = sbr.rel (0) target = $region21
    $region20: #{tpu_custom_call.1} parent=1 // pred_region
      %283 = dma.done [#allocation3], 32
    $region21: #{tpu_custom_call.1} parent=1 // pred_fallthru
      _
    %284 = vsyncpa [#allocation3], 1

</llo_original>
